<compile_context>
chip_gen: v6e
topology: v6e:2x2x1
jax: 0.10.0
libtpu: 0.0.40
codegen_flags: <defaults>
</compile_context>

<pallas_src>
import functools
import math

import jax
import jax.numpy as jnp
from jax import lax
from jax.experimental import pallas as pl
from jax.experimental.pallas import tpu as pltpu

LRELU_SLOPE = 0.1
MAX_TILE = 512                      # time tile (lanes); re-derived per layer if Tout < 512
VMEM_LIMIT_BYTES = 48 * 1024 * 1024  # explicit budget: fits v7x's 64 MiB, fine on v5e/v6e


def get_padding(kernel_size, dilation=1):
    return (kernel_size * dilation - dilation) // 2


def _round_up(n, m):
    return -(-n // m) * m


def _tiling(out_valid, max_tile=MAX_TILE):
    tile = min(max_tile, _round_up(max(out_valid, 1), 128))
    tiles = -(-out_valid // tile)
    return tile, tiles, tile * tiles


# ----------------------------------------------------------------------------
# Generic time-tiled 1-D convolution kernel (stride 1, arbitrary dilation).
# Fused: leaky_relu pre-activation, bias, up to 2 residual adds, tanh,
#        output tail zeroing.  One MXU matmul per tile (im2col).
# ----------------------------------------------------------------------------
def _conv_kernel(*refs, K, dil, tile_t, out_valid, pre_slope, post_tanh,
                 has_halo, n_res, kc1):
    i = 0
    x_ref = refs[i]; i += 1
    h_ref = None
    if has_halo:
        h_ref = refs[i]; i += 1
    w_ref = refs[i]; b_ref = refs[i + 1]; i += 2
    res_refs = refs[i:i + n_res]; i += n_res
    o_ref = refs[i]

    xw = x_ref[0]                                       # (Cin, tile_t) bf16
    if has_halo:
        xw = jnp.concatenate([xw, h_ref[0, 0]], axis=-1)  # (Cin, tile_t + halo)
    if pre_slope > 0.0:                                 # fused leaky_relu
        xw = jnp.where(xw >= 0, xw, pre_slope * xw)

    if K == 1:
        slab = xw                                       # (Cin, tile_t)
    else:                                               # im2col: one matmul for all K taps
        slab = jnp.concatenate(
            [xw[:, k * dil:k * dil + tile_t] for k in range(K)], axis=0)

    if kc1:                                             # K*Cin == 1: broadcast multiply
        acc = w_ref[...].astype(jnp.float32) * slab.astype(jnp.float32)
    else:
        acc = jnp.dot(w_ref[...], slab, preferred_element_type=jnp.float32)

    acc = acc + b_ref[...]                              # (Cout, 1) f32 bias
    for r in res_refs:                                  # fused residual adds
        acc = acc + r[0].astype(jnp.float32)
    if post_tanh:
        acc = jnp.tanh(acc)

    # zero the padded tail so downstream right-edge reads see conv zero-padding
    col = lax.broadcasted_iota(jnp.int32, (1, tile_t), 1) + pl.program_id(1) * tile_t
    acc = jnp.where(col < out_valid, acc, 0.0)
    o_ref[0] = acc.astype(o_ref.dtype)


def conv1d_tiled(x, w2, b2, *, K, dil=1, padding=0, out_valid,
                 pre_slope=0.0, post_tanh=False, residuals=(),
                 out_dtype=jnp.bfloat16, max_tile=None):
    """x: (B, Cin, Lbuf) bf16 (zeros beyond the valid signal).
       w2: (Cout, K*Cin) bf16 im2col-stacked weights, b2: (Cout, 1) f32.
       Returns (B, Cout, ceil(out_valid/TILE)*TILE), zeros beyond out_valid."""
    B, Cin, Lbuf = x.shape
    Cout = w2.shape[0]
    assert w2.shape[1] == K * Cin
    tile, tiles, plen = _tiling(out_valid, max_tile or MAX_TILE)
    halo = (K - 1) * dil
    need = plen + halo
    right = max(0, need - padding - Lbuf)
    if padding > 0 or right > 0:
        x = jnp.pad(x, ((0, 0), (0, 0), (padding, right)))
    # TODO(synk): left/right zero padding is still one XLA pad pass per conv;
    # in-kernel masked edge loads would remove it entirely.

    inputs = [x]
    in_specs = [pl.BlockSpec((1, Cin, tile), lambda b, t: (b, 0, t))]
    if halo > 0:
        # tiny overlapped-halo side input: (B, tiles, Cin, halo)
        starts = (jnp.arange(tiles) + 1) * tile
        idx = starts[:, None] + jnp.arange(halo)[None, :]
        xh = jnp.transpose(x[:, :, idx], (0, 2, 1, 3))
        inputs.append(xh)
        in_specs.append(pl.BlockSpec((1, 1, Cin, halo), lambda b, t: (b, t, 0, 0)))
    inputs += [w2, b2]
    in_specs += [pl.BlockSpec((Cout, K * Cin), lambda b, t: (0, 0)),
                 pl.BlockSpec((Cout, 1), lambda b, t: (0, 0))]
    for r in residuals:
        assert r.shape == (B, Cout, plen), (r.shape, (B, Cout, plen))
        inputs.append(r)
        in_specs.append(pl.BlockSpec((1, Cout, tile), lambda b, t: (b, 0, t)))

    kernel = functools.partial(
        _conv_kernel, K=K, dil=dil, tile_t=tile, out_valid=out_valid,
        pre_slope=float(pre_slope), post_tanh=post_tanh, has_halo=halo > 0,
        n_res=len(residuals), kc1=(K * Cin == 1))

    return pl.pallas_call(
        kernel,
        out_shape=jax.ShapeDtypeStruct((B, Cout, plen), out_dtype),
        grid=(B, tiles),
        in_specs=in_specs,
        out_specs=pl.BlockSpec((1, Cout, tile), lambda b, t: (b, 0, t)),
        compiler_params=pltpu.CompilerParams(
            dimension_semantics=("parallel", "parallel"),
            vmem_limit_bytes=VMEM_LIMIT_BYTES),
    )(*inputs)


# ----------------------------------------------------------------------------
# Weight preparation (layout + polyphase / phase-decomposition + bf16 cast).
# ----------------------------------------------------------------------------
def _prep_conv(w, b, scale=1.0):
    Cout, Cin, K = w.shape
    w2 = (jnp.transpose(w, (0, 2, 1)).reshape(Cout, K * Cin) * scale).astype(jnp.bfloat16)
    return {'w2': w2, 'b': jnp.asarray(b, jnp.float32).reshape(Cout, 1),
            'K': K, 'Cin': Cin, 'Cout': Cout}


def _prep_convtr(w, b, *, stride, pad, scale):
    """PyTorch ConvTranspose1d weight (Cin, Cout, K) -> polyphase stride-1 conv
       producing Cout*stride channels with Kq = ceil(K/stride) taps."""
    Cin, Cout, K = w.shape
    s = stride
    Kq = -(-K // s)
    wpad = jnp.pad(w, ((0, 0), (0, 0), (0, Kq * s - K)))
    wr = wpad.reshape(Cin, Cout, Kq, s)             # tap index j = l*s + r
    wt = jnp.transpose(wr, (1, 3, 0, 2))            # (Cout, s, Cin, Kq)  [co, r, ci, l]
    wt = jnp.flip(wt, axis=-1)                      # correlation form
    wpoly = wt.reshape(Cout * s, Cin, Kq) * scale
    bpoly = jnp.repeat(jnp.asarray(b, jnp.float32), s)
    d = _prep_conv(wpoly, bpoly)
    d.update(stride=s, pad=pad, K_orig=K, Kq=Kq, Cout_t=Cout)
    return d


def _prep_strided(w, b, *, stride, pad):
    """Strided Conv1d with Cin==1 -> phase-decomposed stride-1 conv (Cin=stride)."""
    Cout, _, K = w.shape
    s = stride
    Kq = -(-K // s)
    wpad = jnp.pad(w, ((0, 0), (0, 0), (0, Kq * s - K)))
    wph = jnp.transpose(wpad.reshape(Cout, Kq, s), (0, 2, 1))   # (Cout, s, Kq)
    d = _prep_conv(wph, b)
    d.update(stride=s, pad=pad)
    return d


def prepare_params(h, p):
    nk = len(h.resblock_kernel_sizes)
    q = {'source': {'w': jnp.asarray(p['lin_w'], jnp.float32),
                    'b': jnp.asarray(p['lin_b'], jnp.float32).reshape(1, 1)}}
    q['conv_pre'] = _prep_conv(p['conv_pre_w'], p['conv_pre_b'])
    q['ups'] = []
    for i, up in enumerate(p['ups']):
        scale = (1.0 / nk) if i > 0 else 1.0        # fold /num_kernels of prev stage
        q['ups'].append(_prep_convtr(up['w'], up['b'], stride=up['stride'],
                                     pad=up['pad'], scale=scale))
    q['noise_convs'] = []
    for nc in p['noise_convs']:
        if nc['stride'] > 1:
            q['noise_convs'].append(_prep_strided(nc['w'], nc['b'],
                                                  stride=nc['stride'], pad=nc['pad']))
        else:
            d = _prep_conv(nc['w'], nc['b'])
            d.update(stride=1, pad=nc['pad'])
            q['noise_convs'].append(d)
    q['resblocks'] = []
    for rb in p['resblocks']:
        if rb['type'] == 1:
            q['resblocks'].append({
                'type': 1, 'k': rb['k'],
                'convs1': [dict(_prep_conv(c['w'], c['b']), d=c['d']) for c in rb['convs1']],
                'convs2': [dict(_prep_conv(c['w'], c['b']), d=c['d']) for c in rb['convs2']]})
        else:
            q['resblocks'].append({
                'type': 2, 'k': rb['k'],
                'convs': [dict(_prep_conv(c['w'], c['b']), d=c['d']) for c in rb['convs']]})
    q['conv_post'] = _prep_conv(p['conv_post_w'], p['conv_post_b'], scale=1.0 / nk)
    return q


# ----------------------------------------------------------------------------
# Transposed / strided conv forwards built on the tiled conv kernel.
# ----------------------------------------------------------------------------
def conv_transpose_forward(x, up, *, T_valid, pre_slope):
    """Polyphase ConvTranspose1d with fused leaky_relu.  Returns (x_up, N)."""
    s, p, K, Kq, Cout = up['stride'], up['pad'], up['K_orig'], up['Kq'], up['Cout_t']
    Q = T_valid + Kq - 1
    yph = conv1d_tiled(x, up['w2'], up['b'], K=Kq, padding=Kq - 1,
                       out_valid=Q, pre_slope=pre_slope)            # (B, Cout*s, plenQ)
    B = x.shape[0]
    PQ = yph.shape[-1]
    yfull = yph.reshape(B, Cout, s, PQ).transpose(0, 1, 3, 2).reshape(B, Cout, PQ * s)
    N = (T_valid - 1) * s - 2 * p + K
    _, _, plenN = _tiling(N)
    xup = yfull[:, :, p:p + N]
    if plenN > N:
        xup = jnp.pad(xup, ((0, 0), (0, 0), (0, plenN - N)))
    return xup, N


def noise_conv_forward(nc, har, *, out_valid, residual):
    """Noise conv with the post-upsample add fused via the residual path."""
    B = har.shape[0]
    if nc['stride'] == 1:
        return conv1d_tiled(har, nc['w2'], nc['b'], K=nc['K'], padding=nc['pad'],
                            out_valid=out_valid, residuals=(residual,))
    s, p, Kq = nc['stride'], nc['pad'], nc['K']
    need = (out_valid + Kq - 1) * s
    Lb = har.shape[-1]
    right = max(0, need - p - Lb)
    hp = jnp.pad(har, ((0, 0), (0, 0), (p, right)))[:, 0, :need]    # (B, need)
    xph = jnp.transpose(hp.reshape(B, need // s, s), (0, 2, 1))     # (B, s, Q')
    return conv1d_tiled(xph, nc['w2'], nc['b'], K=Kq, padding=0,
                        out_valid=out_valid, residuals=(residual,))


def resblock_forward(rb, x, N, accum):
    """Returns resblock(x) (+ accum fused into the final conv if accum given)."""
    k = rb['k']
    if rb['type'] == 1:
        n_pairs = len(rb['convs1'])
        for idx, (c1, c2) in enumerate(zip(rb['convs1'], rb['convs2'])):
            xt = conv1d_tiled(x, c1['w2'], c1['b'], K=c1['K'], dil=c1['d'],
                              padding=get_padding(k, c1['d']), out_valid=N,
                              pre_slope=LRELU_SLOPE)
            res = (x,) if (idx < n_pairs - 1 or accum is None) else (x, accum)
            x = conv1d_tiled(xt, c2['w2'], c2['b'], K=c2['K'], dil=1,
                             padding=get_padding(k, 1), out_valid=N,
                             pre_slope=LRELU_SLOPE, residuals=res)
        return x
    n_convs = len(rb['convs'])
    for idx, c in enumerate(rb['convs']):
        res = (x,) if (idx < n_convs - 1 or accum is None) else (x, accum)
        x = conv1d_tiled(x, c['w2'], c['b'], K=c['K'], dil=c['d'],
                         padding=get_padding(k, c['d']), out_valid=N,
                         pre_slope=LRELU_SLOPE, residuals=res)
    return x


# ----------------------------------------------------------------------------
# SineGen / SourceModuleHnNSF.
# Cumulative-phase (cumsum) + interpolation + sin + Gaussian sampling stay in
# plain JAX; the tail (amp/uv mix, noise add, 9->1 linear, tanh) is one fused
# Pallas kernel over time tiles.
# ----------------------------------------------------------------------------
def _source_tail_kernel(s_ref, uv_ref, n_ref, w_ref, b_ref, o_ref, *,
                        tile_l, L_valid, sine_amp, noise_std):
    s = s_ref[0]                          # (dim, tile)  sin(2*pi*phase)
    uv = uv_ref[0]                        # (1,  tile)
    nz = n_ref[0]                         # (dim, tile)  standard normal
    namp = uv * noise_std + (1.0 - uv) * (sine_amp / 3.0)
    mix = s * (sine_amp * uv) + namp * nz
    merged = jnp.dot(w_ref[...], mix, preferred_element_type=jnp.float32) + b_ref[...]
    out = jnp.tanh(merged)
    col = lax.broadcasted_iota(jnp.int32, (1, tile_l), 1) + pl.program_id(1) * tile_l
    out = jnp.where(col < L_valid, out, 0.0)
    o_ref[0] = out.astype(o_ref.dtype)


def source_forward(sp, f0, upp, key, sampling_rate, harmonic_num=8,
                   sine_amp=0.1, noise_std=0.003, voiced_threshold=0.0):
    dim = harmonic_num + 1
    B, T = f0.shape
    L = T * upp
    f0e = f0[:, None, :].astype(jnp.float32)                            # (B,1,T)
    fn = f0e * jnp.arange(1, dim + 1, dtype=jnp.float32).reshape(1, dim, 1)
    rad = jnp.mod(fn / sampling_rate, 1.0)                              # (B,dim,T)

    k1, k2 = jax.random.split(key)
    rand_ini = jax.random.uniform(k1, (1, dim), jnp.float32).at[:, 0].set(0.0)
    rad = rad.at[:, :, 0].add(rand_ini)

    tmp = jnp.cumsum(rad, axis=-1) * upp                                # (B,dim,T)
    if T > 1:                                                           # linear, align_corners=True
        pos = jnp.arange(L, dtype=jnp.float32) * ((T - 1) / (L - 1))
    else:
        pos = jnp.zeros((L,), jnp.float32)
    i0 = jnp.floor(pos).astype(jnp.int32)
    i1 = jnp.minimum(i0 + 1, T - 1)
    wl = pos - i0.astype(jnp.float32)
    tmp_i = tmp[:, :, i0] * (1.0 - wl) + tmp[:, :, i1] * wl             # (B,dim,L)

    rad_i = jnp.repeat(rad, upp, axis=-1)                               # nearest
    tmp_i = jnp.mod(tmp_i, 1.0)
    diff = tmp_i[:, :, 1:] - tmp_i[:, :, :-1]
    shift = jnp.concatenate([jnp.zeros((B, dim, 1), jnp.float32),
                             (diff < 0).astype(jnp.float32)], axis=-1)
    phase = jnp.cumsum(rad_i + shift, axis=-1)                          # (B,dim,L)
    # TODO(synk): sin() and Gaussian sampling kept in XLA (no guaranteed Mosaic
    # lowering for sin/cos); fold into the tail kernel when available.
    sines = jnp.sin(phase * (2.0 * jnp.pi))

    uv = jnp.repeat((f0 > voiced_threshold).astype(jnp.float32), upp, axis=-1)[:, None, :]

    tile, tiles, plen = _tiling(L)
    pad = plen - L
    sines = jnp.pad(sines, ((0, 0), (0, 0), (0, pad)))
    uv = jnp.pad(uv, ((0, 0), (0, 0), (0, pad)))
    noise = jax.random.normal(k2, (B, dim, plen), jnp.float32)

    kernel = functools.partial(_source_tail_kernel, tile_l=tile, L_valid=L,
                               sine_amp=sine_amp, noise_std=noise_std)
    return pl.pallas_call(
        kernel,
        out_shape=jax.ShapeDtypeStruct((B, 1, plen), jnp.bfloat16),
        grid=(B, tiles),
        in_specs=[pl.BlockSpec((1, dim, tile), lambda b, t: (b, 0, t)),
                  pl.BlockSpec((1, 1, tile), lambda b, t: (b, 0, t)),
                  pl.BlockSpec((1, dim, tile), lambda b, t: (b, 0, t)),
                  pl.BlockSpec((1, dim), lambda b, t: (0, 0)),
                  pl.BlockSpec((1, 1), lambda b, t: (0, 0))],
        out_specs=pl.BlockSpec((1, 1, tile), lambda b, t: (b, 0, t)),
        compiler_params=pltpu.CompilerParams(
            dimension_semantics=("parallel", "parallel"),
            vmem_limit_bytes=VMEM_LIMIT_BYTES),
    )(sines, uv, noise, sp['w'], sp['b'])


# ----------------------------------------------------------------------------
# Generator forward
# ----------------------------------------------------------------------------
def generator_forward(h, q, x_mel, f0, key):
    upp = int(math.prod(h.upsample_rates))
    B, T = f0.shape
    L = T * upp
    har = source_forward(q['source'], f0, upp, key, h.sampling_rate)    # (B,1,plenL) bf16

    x = x_mel.astype(jnp.bfloat16)
    N = x_mel.shape[-1]
    cp = q['conv_pre']
    x = conv1d_tiled(x, cp['w2'], cp['b'], K=cp['K'], padding=3, out_valid=N)

    nk = len(h.resblock_kernel_sizes)
    for i in range(len(h.upsample_rates)):
        xup, N = conv_transpose_forward(x, q['ups'][i], T_valid=N, pre_slope=LRELU_SLOPE)
        # fused: x = ups(x) + noise_conv(har)   (residual path inside the kernel)
        x = noise_conv_forward(q['noise_convs'][i], har, out_valid=N, residual=xup)
        accum = None
        for j in range(nk):
            accum = resblock_forward(q['resblocks'][i * nk + j], x, N, accum)
        x = accum  # /num_kernels folded into the next stage's (or conv_post's) weights

    po = q['conv_post']
    y = conv1d_tiled(x, po['w2'], po['b'], K=po['K'], padding=3, out_valid=L,
                     pre_slope=0.01, post_tanh=True, out_dtype=jnp.float32)
    return y[:, :, :L]


# ----------------------------------------------------------------------------
# Hyperparameters and deterministic parameter init (mirrors the PyTorch module)
# ----------------------------------------------------------------------------
class HParams:
    num_mels = 8
    upsample_initial_channel = 16
    upsample_rates = (2, 2)
    upsample_kernel_sizes = (4, 4)
    resblock = '1'
    resblock_kernel_sizes = (3, 5)
    resblock_dilation_sizes = ((1, 3, 5), (1, 3, 5))
    sampling_rate = 16000


def init_params(h, key):
    keys = iter(jax.random.split(key, 512))

    def nrm(shape, scale=0.01):
        return scale * jax.random.normal(next(keys), shape, jnp.float32)

    p = {}
    p['lin_w'] = nrm((1, 9), 0.3)
    p['lin_b'] = nrm((1,), 0.1)
    uic = h.upsample_initial_channel
    p['conv_pre_w'] = nrm((uic, h.num_mels, 7))
    p['conv_pre_b'] = nrm((uic,), 0.01)
    p['ups'], p['noise_convs'], p['resblocks'] = [], [], []

    ch_in = uic
    for i, (u, k) in enumerate(zip(h.upsample_rates, h.upsample_kernel_sizes)):
        c_cur = uic // 2 ** (i + 1)
        p['ups'].append({'w': nrm((ch_in, c_cur, k)), 'b': nrm((c_cur,), 0.01),
                         'stride': u, 'pad': (k - u) // 2})
        if i + 1 < len(h.upsample_rates):
            s = int(math.prod(h.upsample_rates[i + 1:]))
            p['noise_convs'].append({'w': nrm((c_cur, 1, 2 * s), 0.05),
                                     'b': nrm((c_cur,), 0.01),
                                     'stride': s, 'pad': s // 2})
        else:
            p['noise_convs'].append({'w': nrm((c_cur, 1, 1), 0.05),
                                     'b': nrm((c_cur,), 0.01),
                                     'stride': 1, 'pad': 0})
        ch_in = c_cur

    ch = uic
    for _ in range(len(h.upsample_rates)):
        ch //= 2
        for k, dils in zip(h.resblock_kernel_sizes, h.resblock_dilation_sizes):
            if h.resblock == '1':
                rb = {'type': 1, 'k': k,
                      'convs1': [{'w': nrm((ch, ch, k)), 'b': nrm((ch,), 0.01), 'd': d}
                                 for d in dils],
                      'convs2': [{'w': nrm((ch, ch, k)), 'b': nrm((ch,), 0.01), 'd': 1}
                                 for _ in dils]}
            else:
                rb = {'type': 2, 'k': k,
                      'convs': [{'w': nrm((ch, ch, k)), 'b': nrm((ch,), 0.01), 'd': d}
                                for d in dils[:2]]}
            p['resblocks'].append(rb)

    p['conv_post_w'] = nrm((1, ch, 7))
    p['conv_post_b'] = nrm((1,), 0.01)
    return p


if __name__ == "__main__":
    h = HParams()
    key = jax.random.PRNGKey(0)
    k_param, k_mel, k_noise = jax.random.split(key, 3)

    # batch=1 (the SineGen cumsum_shift cat in the reference code assumes B=1)
    B, T_mel = 1, 8
    x_mel = jax.random.normal(k_mel, (B, h.num_mels, T_mel), jnp.float32)
    f0 = jnp.array([[220.0, 230.0, 0.0, 0.0, 180.0, 200.0, 210.0, 0.0]],
                   dtype=jnp.float32)                        # (B, T_mel)

    params = init_params(h, k_param)
    qparams = prepare_params(h, params)
    out = generator_forward(h, qparams, x_mel, f0, k_noise)  # (B, 1, T_mel * prod(rates))
    out = jax.block_until_ready(out)

    assert out.shape == (B, 1, T_mel * int(math.prod(h.upsample_rates))), out.shape
    assert bool(jnp.all(jnp.isfinite(out)))
    print("KERNEL_OK")
</pallas_src>

<mosaic_0001>
module attributes {stable_mosaic.version = 11 : i64} {
  func.func @_source_tail_kernel(%arg0: i32, %arg1: i32, %arg2: memref<1x9x128xf32, #tpu.memory_space<vmem>>, %arg3: memref<1x1x128xf32, #tpu.memory_space<vmem>>, %arg4: memref<1x9x128xf32, #tpu.memory_space<vmem>>, %arg5: memref<1x9xf32, #tpu.memory_space<vmem>>, %arg6: memref<1x1xf32, #tpu.memory_space<vmem>>, %arg7: memref<1x1x128xbf16, #tpu.memory_space<vmem>>) attributes {dimension_semantics = [#tpu.dimension_semantics<parallel>, #tpu.dimension_semantics<parallel>], iteration_bounds = array<i64: 1, 1>, scalar_prefetch = 0 : i64, scratch_operands = 0 : i64, tpu.core_type = #tpu.core_type<tc>, window_params = [{transform_indices = @transform_0, window_bounds = array<i64: 1, 9, 128>}, {transform_indices = @transform_1, window_bounds = array<i64: 1, 1, 128>}, {transform_indices = @transform_2, window_bounds = array<i64: 1, 9, 128>}, {pipeline_mode = #tpu.pipeline_mode<synchronous>, transform_indices = @transform_3, window_bounds = array<i64: 1, 9>}, {pipeline_mode = #tpu.pipeline_mode<synchronous>, transform_indices = @transform_4, window_bounds = array<i64: 1, 1>}, {transform_indices = @transform_5, window_bounds = array<i64: 1, 1, 128>}]} {
    %c0 = arith.constant 0 : index
    %c0_0 = arith.constant 0 : index
    %c0_1 = arith.constant 0 : index
    %0 = vector.load %arg2[%c0, %c0_0, %c0_1] : memref<1x9x128xf32, #tpu.memory_space<vmem>>, vector<1x9x128xf32>
    %1 = vector.shape_cast %0 : vector<1x9x128xf32> to vector<9x128xf32>
    %c0_2 = arith.constant 0 : index
    %c0_3 = arith.constant 0 : index
    %c0_4 = arith.constant 0 : index
    %2 = vector.load %arg3[%c0_2, %c0_3, %c0_4] : memref<1x1x128xf32, #tpu.memory_space<vmem>>, vector<1x1x128xf32>
    %3 = vector.shape_cast %2 : vector<1x1x128xf32> to vector<1x128xf32>
    %c0_5 = arith.constant 0 : index
    %c0_6 = arith.constant 0 : index
    %c0_7 = arith.constant 0 : index
    %4 = vector.load %arg4[%c0_5, %c0_6, %c0_7] : memref<1x9x128xf32, #tpu.memory_space<vmem>>, vector<1x9x128xf32>
    %5 = vector.shape_cast %4 : vector<1x9x128xf32> to vector<9x128xf32>
    %cst = arith.constant 3.000000e-03 : f32
    %6 = vector.broadcast %cst : f32 to vector<1x128xf32>
    %7 = arith.mulf %3, %6 : vector<1x128xf32>
    %cst_8 = arith.constant 1.000000e+00 : f32
    %8 = vector.broadcast %cst_8 : f32 to vector<1x128xf32>
    %9 = arith.subf %8, %3 : vector<1x128xf32>
    %cst_9 = arith.constant 0.0333333351 : f32
    %10 = vector.broadcast %cst_9 : f32 to vector<1x128xf32>
    %11 = arith.mulf %9, %10 : vector<1x128xf32>
    %12 = arith.addf %7, %11 : vector<1x128xf32>
    %cst_10 = arith.constant 1.000000e-01 : f32
    %13 = vector.broadcast %cst_10 : f32 to vector<1x128xf32>
    %14 = arith.mulf %13, %3 : vector<1x128xf32>
    %15 = vector.broadcast %14 : vector<1x128xf32> to vector<9x128xf32>
    %16 = arith.mulf %1, %15 : vector<9x128xf32>
    %17 = vector.broadcast %12 : vector<1x128xf32> to vector<9x128xf32>
    %18 = arith.mulf %17, %5 : vector<9x128xf32>
    %19 = arith.addf %16, %18 : vector<9x128xf32>
    %c0_11 = arith.constant 0 : index
    %c0_12 = arith.constant 0 : index
    %20 = vector.load %arg5[%c0_11, %c0_12] : memref<1x9xf32, #tpu.memory_space<vmem>>, vector<1x9xf32>
    %cst_13 = arith.constant dense<0.000000e+00> : vector<1x128xf32>
    %21 = tpu.matmul %20, %19, %cst_13 {dimension_numbers = #tpu.dot_dimension_numbers<[1], [0], [0], [1], [0, 0, 1, 1], [], []>} : vector<1x9xf32>, vector<9x128xf32>, vector<1x128xf32> -> vector<1x128xf32>
    %c0_14 = arith.constant 0 : index
    %c0_15 = arith.constant 0 : index
    %22 = vector.load %arg6[%c0_14, %c0_15] : memref<1x1xf32, #tpu.memory_space<vmem>>, vector<1x1xf32>
    %23 = vector.broadcast %22 : vector<1x1xf32> to vector<1x128xf32>
    %24 = arith.addf %21, %23 : vector<1x128xf32>
    %25 = math.tanh %24 : vector<1x128xf32>
    %26 = tpu.iota {dimensions = array<i32: 1>} : vector<1x128xi32>
    %c128_i32 = arith.constant 128 : i32
    %27 = arith.muli %arg1, %c128_i32 : i32
    %28 = vector.broadcast %27 : i32 to vector<1x128xi32>
    %29 = arith.addi %26, %28 : vector<1x128xi32>
    %c32_i32 = arith.constant 32 : i32
    %30 = vector.broadcast %c32_i32 : i32 to vector<1x128xi32>
    %31 = arith.cmpi slt, %29, %30 : vector<1x128xi32>
    %cst_16 = arith.constant 0.000000e+00 : f32
    %32 = vector.broadcast %cst_16 : f32 to vector<1x128xf32>
    %33 = arith.select %31, %25, %32 : vector<1x128xi1>, vector<1x128xf32>
    %34 = arith.truncf %33 : vector<1x128xf32> to vector<1x128xbf16>
    %c0_17 = arith.constant 0 : index
    %c0_18 = arith.constant 0 : index
    %c0_19 = arith.constant 0 : index
    %35 = vector.load %arg7[%c0_17, %c0_18, %c0_19] : memref<1x1x128xbf16, #tpu.memory_space<vmem>>, vector<1x1x128xbf16>
    %36 = vector.shape_cast %35 : vector<1x1x128xbf16> to vector<1x128xbf16>
    %37 = vector.shape_cast %34 : vector<1x128xbf16> to vector<1x1x128xbf16>
    tpu.vector_store %arg7[%c0_17, %c0_18, %c0_19], %37 {strides = array<i32>} : memref<1x1x128xbf16, #tpu.memory_space<vmem>>, vector<1x1x128xbf16>,
    return
  }
  func.func @transform_0(%arg0: i32, %arg1: i32) -> (i32, i32, i32) {
    %c0_i32 = arith.constant 0 : i32
    %c0_i32_0 = arith.constant 0 : i32
    return %arg0, %c0_i32, %arg1 : i32, i32, i32
  }
  func.func @transform_1(%arg0: i32, %arg1: i32) -> (i32, i32, i32) {
    %c0_i32 = arith.constant 0 : i32
    %c0_i32_0 = arith.constant 0 : i32
    return %arg0, %c0_i32, %arg1 : i32, i32, i32
  }
  func.func @transform_2(%arg0: i32, %arg1: i32) -> (i32, i32, i32) {
    %c0_i32 = arith.constant 0 : i32
    %c0_i32_0 = arith.constant 0 : i32
    return %arg0, %c0_i32, %arg1 : i32, i32, i32
  }
  func.func @transform_3(%arg0: i32, %arg1: i32) -> (i32, i32) {
    %c0_i32 = arith.constant 0 : i32
    %c0_i32_0 = arith.constant 0 : i32
    %c0_i32_1 = arith.constant 0 : i32
    return %c0_i32, %c0_i32_0 : i32, i32
  }
  func.func @transform_4(%arg0: i32, %arg1: i32) -> (i32, i32) {
    %c0_i32 = arith.constant 0 : i32
    %c0_i32_0 = arith.constant 0 : i32
    %c0_i32_1 = arith.constant 0 : i32
    return %c0_i32, %c0_i32_0 : i32, i32
  }
  func.func @transform_5(%arg0: i32, %arg1: i32) -> (i32, i32, i32) {
    %c0_i32 = arith.constant 0 : i32
    %c0_i32_0 = arith.constant 0 : i32
    return %arg0, %c0_i32, %arg1 : i32, i32, i32
  }
}

</mosaic_0001>

<llo_original>
// kernel: tpu_custom_call.1
$region0: #{tpu_custom_call.1}
  #allocation0 [shape = 'u32[]', space=smem, size = 0x4, offset = 0x4, fixed_abs, tag = 'smem constant byte address 0x4 - core index']
  #allocation1 [shape = 'u32[144,128]{1,0:T(1,128)}', space=vmem, size = 0x12000, scoped, tag = 'internal scratch']
  #allocation2 [shape = 'f32[1,1]{1,0:T(1,128)S(1)}', space=vmem, size = 0x200, scoped, tag = 'scoped memory for tpu_custom_call.1']
  %s0 = inlined_call_operand.vmem [shape: f32[1,9,128], index: 0, kind: input, shape index: {}]
  %s1 = inlined_call_operand.vmem [shape: f32[1,1,128], index: 1, kind: input, shape index: {}]
  %s2 = inlined_call_operand.vmem [shape: f32[1,9,128], index: 2, kind: input, shape index: {}]
  %s3 = inlined_call_operand.vmem [shape: f32[1,9], index: 3, kind: input, shape index: {}]
  %s4 = inlined_call_operand.<no memory space> [shape: f32[1,1], index: 4, kind: input, shape index: {}]
  %s5 = inlined_call_operand.hbm [shape: bf16[1,1,128], index: 5, kind: output, shape index: {}]
  %s6 = sld [smem:[#allocation0]]
  $region30: #{tpu_custom_call.1} parent=0
    _
  %s8 = ssub.s32 1, %s6
  %s9 = scalar_select 0, %s8, %s6
  %v10 = vstv %s4
  %11 = vst [vmem:[#allocation2] sm:$0x1] %v10
  $region1: #{tpu_custom_call.1} parent=0
    #allocation3 [shape = 'u8[512]{0}', space=vmem, size = 0x400, scoped, tag = 'output window, operand 0, single buffered']
    #allocation4 [shape = 's32[1]{0}', space=sflag, size = 0x4, scoped, tag = 'scoped memory for tpu_custom_call.1']
    %12 = vsyncpa [#allocation4], 0
    // Predicated region
    $region2: #{tpu_custom_call.1} parent=1 // pred_check
      _
    $region3: #{tpu_custom_call.1} parent=1 // pred_check_branch
      %14 = sbr.rel (0) target = $region5
    $region4: #{tpu_custom_call.1} parent=1 // pred_region
      _
    $region5: #{tpu_custom_call.1} parent=1 // pred_fallthru
      _
    // Predicated region
    $region6: #{tpu_custom_call.1} parent=1 // pred_check
      _
    $region7: #{tpu_custom_call.1} parent=1 // pred_check_branch
      %16 = sbr.rel (0) target = $region9
    $region8: #{tpu_custom_call.1} parent=1 // pred_region
      _
    $region9: #{tpu_custom_call.1} parent=1 // pred_fallthru
      _
    // Predicated region
    $region10: #{tpu_custom_call.1} parent=1 // pred_check
      _
    $region11: #{tpu_custom_call.1} parent=1 // pred_check_branch
      %18 = sbr.rel (0) target = $region13
    $region12: #{tpu_custom_call.1} parent=1 // pred_region
      _
    $region13: #{tpu_custom_call.1} parent=1 // pred_fallthru
      _
    // Predicated region
    $region14: #{tpu_custom_call.1} parent=1 // pred_check
      _
    $region15: #{tpu_custom_call.1} parent=1 // pred_check_branch
      %20 = sbr.rel (0) target = $region17
    $region16: #{tpu_custom_call.1} parent=1 // pred_region
      _
    $region17: #{tpu_custom_call.1} parent=1 // pred_fallthru
      _
    // Predicated region
    $region18: #{tpu_custom_call.1} parent=1 // pred_check
      _
    $region19: #{tpu_custom_call.1} parent=1 // pred_check_branch
      %22 = sbr.rel (0) target = $region21
    $region20: #{tpu_custom_call.1} parent=1 // pred_region
      _
    $region21: #{tpu_custom_call.1} parent=1 // pred_fallthru
      _
    %v23 = vld [vmem:[%s0] sm:$0xff]
    %v24 = vld [vmem:[%s0 + $0x8] sm:$0x1]
    %v25 = vld [vmem:[%s1] sm:$0x1]
    %v26 = vld [vmem:[%s2] sm:$0xff]
    %v27 = vld [vmem:[%s2 + $0x8] sm:$0x1]
    %v28 = vmul.f32 %v25, 0.003
    %v29 = vsub.f32 1.0, %v25
    %v30 = vmul.f32 %v29, 0.033333335
    %v31 = vadd.f32 %v28, %v30
    %v32 = vmul.f32 %v25, 0.1
    %v34 = vlaneseq
    %v35 = vshrl.u32 %v34, 7
    %v36 = vsub.s32 0, %v35
    %v37 = vrot.slane %v32, %v36
    %v39 = vmul.f32 %v23, %v37
    %v40 = vmul.f32 %v24, %v37
    %v42 = vlaneseq
    %v43 = vshrl.u32 %v42, 7
    %v44 = vsub.s32 0, %v43
    %v45 = vrot.slane %v31, %v44
    %v47 = vmul.f32 %v45, %v26
    %v48 = vmul.f32 %v45, %v27
    %v49 = vadd.f32 %v39, %v47
    %v50 = vadd.f32 %v40, %v48
    %v51 = vld [vmem:[%s3] sm:$0x1]
    %v52 = vld [vmem:[#allocation2] sm:$0x1]
    %54 = vset.pattern.permute.xlu0 0
    %55 = vperm.xlu0 %54, %v52
    %v56 = vpop.permute.xlu0 %55
    %v58 = vlaneseq
    %v59 = vshrl.u32 %v58, 7
    %v60 = vsub.s32 0, %v59
    %v61 = vrot.slane %v56, %v60
    %vm62 = vcmask 72704
    %v64 = vsel %vm62, %v51, 0
    %vm66 = vcmask 1040384
    %v68 = vsel %vm66, %v50, 0
    %70 = vmatprep.subr.mxu0 0.0
    %71 = vmatpush1.msra.mxu0 0.0
    %72 = vmatprep.subr.mxu0 0.0
    %73 = vmatpush1.msra.mxu0 0.0
    %74 = vmatprep.subr.mxu0 0.0
    %75 = vmatpush1.msra.mxu0 0.0
    %76 = vmatprep.subr.mxu0 0.0
    %77 = vmatpush1.msra.mxu0 0.0
    %78 = vmatprep.subr.mxu0 0.0
    %79 = vmatpush1.msra.mxu0 0.0
    %80 = vmatprep.subr.mxu0 0.0
    %81 = vmatpush1.msra.mxu0 0.0
    %82 = vmatprep.subr.mxu0 0.0
    %83 = vmatpush1.msra.mxu0 0.0
    %84 = vmatprep.subr.mxu0 0.0
    %85 = vmatpush1.msra.mxu0 0.0
    %86 = vmatprep.subr.mxu0 0.0
    %87 = vmatpush1.msra.mxu0 0.0
    %88 = vmatprep.subr.mxu0 0.0
    %89 = vmatpush1.msra.mxu0 0.0
    %90 = vmatprep.subr.mxu0 0.0
    %91 = vmatpush1.msra.mxu0 0.0
    %92 = vmatprep.subr.mxu0 0.0
    %93 = vmatpush1.msra.mxu0 0.0
    %94 = vmatprep.subr.mxu0 0.0
    %95 = vmatpush1.msra.mxu0 0.0
    %96 = vmatprep.subr.mxu0 0.0
    %97 = vmatpush1.msra.mxu0 0.0
    %98 = vmatprep.subr.mxu0 0.0
    %99 = vmatpush1.msra.mxu0 %v68
    %100 = vmatprep.subr.mxu0 0.0
    %101 = vmatpush1.msra.mxu0 %v49
    %102 = vmatprep.subr.mxu0 0.0
    %103 = vmatpush2.msra.mxu0 0.0
    %104 = vmatprep.subr.mxu0 0.0
    %105 = vmatpush2.msra.mxu0 0.0
    %106 = vmatprep.subr.mxu0 0.0
    %107 = vmatpush2.msra.mxu0 0.0
    %108 = vmatprep.subr.mxu0 0.0
    %109 = vmatpush2.msra.mxu0 0.0
    %110 = vmatprep.subr.mxu0 0.0
    %111 = vmatpush2.msra.mxu0 0.0
    %112 = vmatprep.subr.mxu0 0.0
    %113 = vmatpush2.msra.mxu0 0.0
    %114 = vmatprep.subr.mxu0 0.0
    %115 = vmatpush2.msra.mxu0 0.0
    %116 = vmatprep.subr.mxu0 0.0
    %117 = vmatpush2.msra.mxu0 0.0
    %118 = vmatprep.subr.mxu0 0.0
    %119 = vmatpush2.msra.mxu0 0.0
    %120 = vmatprep.subr.mxu0 0.0
    %121 = vmatpush2.msra.mxu0 0.0
    %122 = vmatprep.subr.mxu0 0.0
    %123 = vmatpush2.msra.mxu0 0.0
    %124 = vmatprep.subr.mxu0 0.0
    %125 = vmatpush2.msra.mxu0 0.0
    %126 = vmatprep.subr.mxu0 0.0
    %127 = vmatpush2.msra.mxu0 0.0
    %128 = vmatprep.subr.mxu0 0.0
    %129 = vmatpush2.msra.mxu0 0.0
    %130 = vmatprep.subr.mxu0 0.0
    %131 = vmatpush2.msra.mxu0 0.0
    %132 = vmatprep.subr.mxu0 0.0
    %133 = vmatpush2.msra.mxu0 0.0
    %134 = vmatprep.mubr.f32.mxu0 0.0
    %135 = vmatmul.mubr.f32.gmra.mxu0 %v64
    %v136 = vpop.f32.mrf.mxu0
    %v137 = vadd.f32 %v61, %v136
    %v138 = vpop.f32.mrf.mxu0
    %139 = vdwg.mxu0
    %v140 = vtanh.pop %v137
    %v141 = vlaneseq
    %v142 = vand.u32 %v141, 127
    %s143 = smul.u32 0, 128
    %v144 = vstv %s143
    %v145 = vadd.s32 %v142, %v144
    %vm146 = vcmp.lt.s32.totalorder %v145, 32
    %v147 = vsel %vm146, %v140, 0.0
    %v148 = vpack.c.bf16 %v147, %v147
    %vm149 = vcmask 1040384
    %vm150 = vsmask.f32 256
    %vm151 = vmand %vm149, %vm150
    %v152 = vld [vmem:[#allocation3] sm:$0x1]
    %v153 = vsel %vm151, %v148, %v152
    %154 = vst [vmem:[#allocation3] sm:$0x1] %v153
    // Predicated region
    $region22: #{tpu_custom_call.1} parent=1 // pred_check
      _
    $region23: #{tpu_custom_call.1} parent=1 // pred_check_branch
      %156 = sbr.rel (0) target = $region25
    $region24: #{tpu_custom_call.1} parent=1 // pred_region
      %s158 = ssub.s32 16, 16
      %159 = vsyncadd [#allocation4], %s158
      %s161 = sshll.u32 [#allocation3], 4
      %s162 = int_to_ptr.vmem [resolvable:$true] %s161
      %164 = dma.vmem_to_hbm [thread:$0]  %s162, 16, %s5, [#allocation4]
    $region25: #{tpu_custom_call.1} parent=1 // pred_fallthru
      _
    // Predicated region
    $region26: #{tpu_custom_call.1} parent=1 // pred_check
      _
    $region27: #{tpu_custom_call.1} parent=1 // pred_check_branch
      %166 = sbr.rel (0) target = $region29
    $region28: #{tpu_custom_call.1} parent=1 // pred_region
      %167 = dma.done [#allocation4], 16
    $region29: #{tpu_custom_call.1} parent=1 // pred_fallthru
      _
    %168 = vsyncpa [#allocation4], 1

</llo_original>
